<compile_context>
chip_gen: v6e
topology: v6e:2x2x1
jax: 0.10.0
libtpu: 0.0.40
codegen_flags: <defaults>
</compile_context>

<pallas_src>
import functools
import math

import jax
import jax.numpy as jnp
from jax.experimental import pallas as pl
from jax.experimental.pallas import tpu as pltpu


# ---------------------------------------------------------------------------
# Kernel bodies
# ---------------------------------------------------------------------------

def _attend_head(Q, K, V, mask_zero, wo_h, out_ref, attnw_ref, acc_ref,
                 *, exact_recip):
    """Per-(batch, head) attention core.

    Q, K: [S, d_k] (Q pre-scaled by 1/sqrt(d_k)); V: [S, d_v];
    mask_zero: int8 [S, S] (nonzero = masked out); wo_h: [d_v, d_model].
    Accumulates the output projection into acc_ref ([S, d_model], f32) across
    the head grid axis and writes out_ref on the last head.
    """
    h = pl.program_id(1)

    # Q @ K^T without an explicit transpose of K (contract last axes).
    scores = jax.lax.dot_general(
        Q, K, (((1,), (1,)), ((), ())),
        preferred_element_type=jnp.float32)                      # [S, S] f32

    # Exact masked_fill semantics of the reference module.
    scores = jnp.where(mask_zero != 0, jnp.float32(-1.0e9), scores)

    # Numerically-stable softmax over the key axis.
    m = jnp.max(scores, axis=-1, keepdims=True)
    e = jnp.exp(scores - m)
    denom = jnp.sum(e, axis=-1, keepdims=True)
    if exact_recip:
        w = e / denom                                            # rows sum to 1
    else:
        w = e * pl.reciprocal(denom, approx=True)                # EUP fast path

    if attnw_ref is not None:
        attnw_ref[0, 0] = w.astype(attnw_ref.dtype)

    ctx = jnp.dot(w.astype(V.dtype), V,
                  preferred_element_type=jnp.float32)            # [S, d_v]

    # Accumulate this head's contribution to the output projection.
    @pl.when(h == 0)
    def _():
        acc_ref[...] = jnp.zeros_like(acc_ref)

    acc_ref[...] += jnp.dot(ctx.astype(wo_h.dtype), wo_h,
                            preferred_element_type=jnp.float32)  # [S, d_model]

    @pl.when(h == pl.num_programs(1) - 1)
    def _():
        out_ref[0] = acc_ref[...].astype(out_ref.dtype)


def _mha_self_kernel(x_ref, mask_ref, wqkv_ref, wo_ref, *rest,
                     d_k, d_v, return_weights):
    """Self-attention path: one fused per-head QKV matmul (key==query==value)."""
    if return_weights:
        out_ref, attnw_ref, acc_ref = rest
    else:
        (out_ref, acc_ref), attnw_ref = rest, None

    x = x_ref[0]                                                 # [S, d_model]
    # Fused per-head projection: [S, 2*d_k + d_v] in one MXU matmul.
    P = jnp.dot(x, wqkv_ref[0], preferred_element_type=jnp.float32)
    P = P.astype(x.dtype)
    Q = P[:, :d_k]                       # already scaled by 1/sqrt(d_k)
    K = P[:, d_k:2 * d_k]
    V = P[:, 2 * d_k:2 * d_k + d_v]

    _attend_head(Q, K, V, mask_ref[0], wo_ref[0], out_ref, attnw_ref, acc_ref,
                 exact_recip=return_weights)


def _mha_cross_kernel(q_ref, k_ref, v_ref, mask_ref, wq_ref, wk_ref, wv_ref,
                      wo_ref, *rest, return_weights):
    """General path: distinct key/query/value tensors (per-head projections)."""
    if return_weights:
        out_ref, attnw_ref, acc_ref = rest
    else:
        (out_ref, acc_ref), attnw_ref = rest, None

    q = q_ref[0]
    k = k_ref[0]
    v = v_ref[0]
    cdt = q.dtype

    Q = jnp.dot(q, wq_ref[0], preferred_element_type=jnp.float32).astype(cdt)
    K = jnp.dot(k, wk_ref[0], preferred_element_type=jnp.float32).astype(cdt)
    V = jnp.dot(v, wv_ref[0], preferred_element_type=jnp.float32).astype(cdt)

    _attend_head(Q, K, V, mask_ref[0], wo_ref[0], out_ref, attnw_ref, acc_ref,
                 exact_recip=return_weights)


# ---------------------------------------------------------------------------
# Wrapper
# ---------------------------------------------------------------------------

def prepare_mha_params(W_Q, W_K, W_V, W_O, *, n_heads, d_k, d_v,
                       compute_dtype=None):
    """Pre-transpose / pre-fuse the PyTorch-layout weights ONCE.

    W_Q/W_K: [H*d_k, d_model], W_V: [H*d_v, d_model], W_O: [d_model, H*d_v].
    The 1/sqrt(d_k) score scale is folded into the Q weights here so the kernel
    never multiplies the scores.
    """
    d_model = W_Q.shape[1]
    scale = jnp.float32(1.0 / math.sqrt(d_k))

    wq = (W_Q.T * scale).reshape(d_model, n_heads, d_k).transpose(1, 0, 2)
    wk = W_K.T.reshape(d_model, n_heads, d_k).transpose(1, 0, 2)
    wv = W_V.T.reshape(d_model, n_heads, d_v).transpose(1, 0, 2)
    wo = W_O.T.reshape(n_heads, d_v, d_model)
    wqkv = jnp.concatenate([wq, wk, wv], axis=-1)   # [H, d_model, 2*d_k + d_v]

    if compute_dtype is not None:
        wq, wk, wv, wo, wqkv = (a.astype(compute_dtype)
                                for a in (wq, wk, wv, wo, wqkv))
    return {"wq": wq, "wk": wk, "wv": wv, "wo": wo, "wqkv": wqkv}


def multi_head_attention(key, query, value, mask, params, *, n_heads, d_k, d_v,
                         return_weights=True, weights_dtype=jnp.float32):
    """Pallas MHA forward (eval mode).

    key/query/value: [B, S, d_model]; mask: [B, S, S] (0 = masked out).
    `params` comes from `prepare_mha_params` (weights pre-fused outside the
    per-call path).  Returns (output [B, S, d_model],
    attn_weights [B, H, S, S] or None).
    """
    B, S, d_model = query.shape
    dtype = query.dtype

    # Compact int8 "is masked" tensor: 4x less mask DMA per grid step.
    mask_zero = (mask == 0).astype(jnp.int8)

    if return_weights:
        out_shape = (jax.ShapeDtypeStruct((B, S, d_model), dtype),
                     jax.ShapeDtypeStruct((B, n_heads, S, S), weights_dtype))
        out_specs = [pl.BlockSpec((1, S, d_model), lambda b, h: (b, 0, 0)),
                     pl.BlockSpec((1, 1, S, S), lambda b, h: (b, h, 0, 0))]
    else:
        out_shape = jax.ShapeDtypeStruct((B, S, d_model), dtype)
        out_specs = pl.BlockSpec((1, S, d_model), lambda b, h: (b, 0, 0))

    x_spec = pl.BlockSpec((1, S, d_model), lambda b, h: (b, 0, 0))
    mask_spec = pl.BlockSpec((1, S, S), lambda b, h: (b, 0, 0))
    wo_spec = pl.BlockSpec((1, d_v, d_model), lambda b, h: (h, 0, 0))

    self_attention = (query is key) and (key is value)
    if self_attention:
        kernel = functools.partial(_mha_self_kernel, d_k=d_k, d_v=d_v,
                                   return_weights=return_weights)
        in_specs = [
            x_spec, mask_spec,
            pl.BlockSpec((1, d_model, 2 * d_k + d_v), lambda b, h: (h, 0, 0)),
            wo_spec,
        ]
        args = (query, mask_zero, params["wqkv"], params["wo"])
    else:
        kernel = functools.partial(_mha_cross_kernel,
                                   return_weights=return_weights)
        in_specs = [
            x_spec, x_spec, x_spec, mask_spec,
            pl.BlockSpec((1, d_model, d_k), lambda b, h: (h, 0, 0)),
            pl.BlockSpec((1, d_model, d_k), lambda b, h: (h, 0, 0)),
            pl.BlockSpec((1, d_model, d_v), lambda b, h: (h, 0, 0)),
            wo_spec,
        ]
        args = (query, key, value, mask_zero,
                params["wq"], params["wk"], params["wv"], params["wo"])

    grid_spec = pltpu.PrefetchScalarGridSpec(
        num_scalar_prefetch=0,
        grid=(B, n_heads),          # head (output-accumulation) axis last
        in_specs=in_specs,
        out_specs=out_specs,
        scratch_shapes=[pltpu.VMEM((S, d_model), jnp.float32)],
    )

    res = pl.pallas_call(
        kernel,
        out_shape=out_shape,
        grid_spec=grid_spec,
        # Head axis carries the output accumulator -> "arbitrary"; batch axis
        # is "parallel" (megacore sharding on v7x).  vmem_limit left at the
        # scoped default: per-head blocks fit comfortably after retiling.
        compiler_params=pltpu.CompilerParams(
            dimension_semantics=("parallel", "arbitrary")),
    )(*args)

    if return_weights:
        out, attn_w = res
        return out, attn_w
    return res, None


# ---------------------------------------------------------------------------
# Pure-JAX reference (mirrors the PyTorch module, eval mode)
# ---------------------------------------------------------------------------

def _reference_mha(key, query, value, mask, W_Q, W_K, W_V, W_O,
                   *, n_heads, d_k, d_v):
    B, S, d_model = query.shape
    proj_k = (key @ W_K.T).reshape(B, S, n_heads, d_k).transpose(0, 2, 1, 3)
    proj_q = (query @ W_Q.T).reshape(B, S, n_heads, d_k).transpose(0, 2, 1, 3)
    proj_v = (value @ W_V.T).reshape(B, S, n_heads, d_v).transpose(0, 2, 1, 3)
    m = mask[:, None, :, :]
    scores = jnp.einsum("bhqd,bhkd->bhqk", proj_q, proj_k) / math.sqrt(d_k)
    scores = jnp.where(m == 0, -1.0e9, scores)
    w = jax.nn.softmax(scores, axis=-1)
    ctx = jnp.einsum("bhqk,bhkd->bhqd", w, proj_v)
    ctx = ctx.transpose(0, 2, 1, 3).reshape(B, S, n_heads * d_v)
    return ctx @ W_O.T, w


if __name__ == "__main__":
    # Small, module-consistent shapes.
    B, S, d_model = 2, 8, 32
    n_heads, d_k, d_v = 4, 8, 8
    dropout = 0.1  # inference mode -> identity

    root = jax.random.PRNGKey(0)
    k1, k2, k3, k4, k5, k6, k7, k8 = jax.random.split(root, 8)

    # Deterministic parameter init (PyTorch Linear layout: [out, in]).
    def init_linear(k, out_f, in_f):
        bound = 1.0 / math.sqrt(in_f)
        return jax.random.uniform(k, (out_f, in_f), jnp.float32, -bound, bound)

    W_Q = init_linear(k1, d_k * n_heads, d_model)
    W_K = init_linear(k2, d_k * n_heads, d_model)
    W_V = init_linear(k3, d_v * n_heads, d_model)
    W_O = init_linear(k4, d_model, d_v * n_heads)

    # Weights pre-fused ONCE, outside the per-call path.
    params = prepare_mha_params(W_Q, W_K, W_V, W_O,
                                n_heads=n_heads, d_k=d_k, d_v=d_v)

    # Padding-style mask: 0 => masked out, 1 => attend; every query row attends
    # to at least one key.
    mask = (jax.random.uniform(k8, (B, S, S)) > 0.2).astype(jnp.float32)
    mask = mask.at[:, :, 0].set(1.0)

    # --- Self-attention (common BERT case): exercises the fused-QKV kernel. ---
    x = jax.random.normal(k5, (B, S, d_model), jnp.float32)
    out_s, w_s = multi_head_attention(
        x, x, x, mask, params, n_heads=n_heads, d_k=d_k, d_v=d_v)
    out_s = jax.block_until_ready(out_s)
    w_s = jax.block_until_ready(w_s)
    ref_out_s, ref_w_s = _reference_mha(
        x, x, x, mask, W_Q, W_K, W_V, W_O, n_heads=n_heads, d_k=d_k, d_v=d_v)
    assert out_s.shape == (B, S, d_model)
    assert w_s.shape == (B, n_heads, S, S)
    assert jnp.allclose(out_s, ref_out_s, atol=1e-4, rtol=1e-4)
    assert jnp.allclose(w_s, ref_w_s, atol=1e-4, rtol=1e-4)

    # --- Cross-attention path (distinct key / query / value tensors). ---
    key_in = jax.random.normal(k5, (B, S, d_model), jnp.float32)
    query_in = jax.random.normal(k6, (B, S, d_model), jnp.float32)
    value_in = jax.random.normal(k7, (B, S, d_model), jnp.float32)
    out_c, w_c = multi_head_attention(
        key_in, query_in, value_in, mask, params,
        n_heads=n_heads, d_k=d_k, d_v=d_v)
    out_c = jax.block_until_ready(out_c)
    ref_out_c, ref_w_c = _reference_mha(
        key_in, query_in, value_in, mask, W_Q, W_K, W_V, W_O,
        n_heads=n_heads, d_k=d_k, d_v=d_v)
    assert jnp.allclose(out_c, ref_out_c, atol=1e-4, rtol=1e-4)
    assert jnp.allclose(w_c, ref_w_c, atol=1e-4, rtol=1e-4)

    # --- No-weights variant: drops the B*H*S*S HBM write + approx reciprocal. ---
    out_nw, w_nw = multi_head_attention(
        x, x, x, mask, params, n_heads=n_heads, d_k=d_k, d_v=d_v,
        return_weights=False)
    out_nw = jax.block_until_ready(out_nw)
    assert w_nw is None
    assert jnp.allclose(out_nw, ref_out_s, atol=5e-3, rtol=5e-3)

    print("KERNEL_OK")
</pallas_src>

<mosaic_0001>
module attributes {stable_mosaic.version = 11 : i64} {
  func.func @_mha_self_kernel(%arg0: i32, %arg1: i32, %arg2: memref<1x8x32xf32, #tpu.memory_space<vmem>>, %arg3: memref<1x8x8xi8, #tpu.memory_space<vmem>>, %arg4: memref<1x32x24xf32, #tpu.memory_space<vmem>>, %arg5: memref<1x8x32xf32, #tpu.memory_space<vmem>>, %arg6: memref<1x8x32xf32, #tpu.memory_space<vmem>>, %arg7: memref<1x1x8x8xf32, #tpu.memory_space<vmem>>, %arg8: memref<8x32xf32, #tpu.memory_space<vmem>>) attributes {dimension_semantics = [#tpu.dimension_semantics<parallel>, #tpu.dimension_semantics<arbitrary>], iteration_bounds = array<i64: 2, 4>, scalar_prefetch = 0 : i64, scratch_operands = 1 : i64, tpu.core_type = #tpu.core_type<tc>, window_params = [{transform_indices = @transform_0, window_bounds = array<i64: 1, 8, 32>}, {transform_indices = @transform_1, window_bounds = array<i64: 1, 8, 8>}, {transform_indices = @transform_2, window_bounds = array<i64: 1, 32, 24>}, {transform_indices = @transform_3, window_bounds = array<i64: 1, 8, 32>}, {transform_indices = @transform_4, window_bounds = array<i64: 1, 8, 32>}, {transform_indices = @transform_5, window_bounds = array<i64: 1, 1, 8, 8>}]} {
    %c0 = arith.constant 0 : index
    %c0_0 = arith.constant 0 : index
    %c0_1 = arith.constant 0 : index
    %0 = vector.load %arg2[%c0, %c0_0, %c0_1] : memref<1x8x32xf32, #tpu.memory_space<vmem>>, vector<1x8x32xf32>
    %1 = vector.shape_cast %0 : vector<1x8x32xf32> to vector<8x32xf32>
    %c0_2 = arith.constant 0 : index
    %c0_3 = arith.constant 0 : index
    %c0_4 = arith.constant 0 : index
    %2 = vector.load %arg4[%c0_2, %c0_3, %c0_4] : memref<1x32x24xf32, #tpu.memory_space<vmem>>, vector<1x32x24xf32>
    %3 = vector.shape_cast %2 : vector<1x32x24xf32> to vector<32x24xf32>
    %cst = arith.constant dense<0.000000e+00> : vector<8x24xf32>
    %4 = tpu.matmul %1, %3, %cst {dimension_numbers = #tpu.dot_dimension_numbers<[1], [0], [0], [1], [0, 0, 1, 1], [], []>} : vector<8x32xf32>, vector<32x24xf32>, vector<8x24xf32> -> vector<8x24xf32>
    %5 = vector.extract_strided_slice %4 {offsets = [0, 0], sizes = [8, 8], strides = [1, 1]} : vector<8x24xf32> to vector<8x8xf32>
    %6 = vector.extract_strided_slice %4 {offsets = [0, 8], sizes = [8, 8], strides = [1, 1]} : vector<8x24xf32> to vector<8x8xf32>
    %7 = vector.extract_strided_slice %4 {offsets = [0, 16], sizes = [8, 8], strides = [1, 1]} : vector<8x24xf32> to vector<8x8xf32>
    %c0_5 = arith.constant 0 : index
    %c0_6 = arith.constant 0 : index
    %c0_7 = arith.constant 0 : index
    %8 = vector.load %arg3[%c0_5, %c0_6, %c0_7] : memref<1x8x8xi8, #tpu.memory_space<vmem>>, vector<1x8x8xi8>
    %9 = vector.shape_cast %8 : vector<1x8x8xi8> to vector<8x8xi8>
    %c0_8 = arith.constant 0 : index
    %c0_9 = arith.constant 0 : index
    %c0_10 = arith.constant 0 : index
    %10 = vector.load %arg5[%c0_8, %c0_9, %c0_10] : memref<1x8x32xf32, #tpu.memory_space<vmem>>, vector<1x8x32xf32>
    %11 = vector.shape_cast %10 : vector<1x8x32xf32> to vector<8x32xf32>
    %cst_11 = arith.constant dense<0.000000e+00> : vector<8x8xf32>
    %12 = tpu.matmul %5, %6, %cst_11 {dimension_numbers = #tpu.dot_dimension_numbers<[1], [1], [0], [0], [0, 0, 1, 0], [], []>} : vector<8x8xf32>, vector<8x8xf32>, vector<8x8xf32> -> vector<8x8xf32>
    %c0_i8 = arith.constant 0 : i8
    %13 = vector.broadcast %c0_i8 : i8 to vector<8x8xi8>
    %14 = arith.cmpi ne, %9, %13 : vector<8x8xi8>
    %cst_12 = arith.constant -1.000000e+09 : f32
    %15 = vector.broadcast %cst_12 : f32 to vector<8x8xf32>
    %16 = arith.select %14, %15, %12 : vector<8x8xi1>, vector<8x8xf32>
    %cst_13 = arith.constant dense<0xFF800000> : vector<8xf32>
    %17 = vector.multi_reduction <maximumf>, %16, %cst_13 [1] : vector<8x8xf32> to vector<8xf32>
    %18 = vector.shape_cast %17 : vector<8xf32> to vector<8x1xf32>
    %19 = vector.broadcast %18 : vector<8x1xf32> to vector<8x8xf32>
    %20 = arith.subf %16, %19 : vector<8x8xf32>
    %21 = math.exp %20 : vector<8x8xf32>
    %cst_14 = arith.constant dense<0.000000e+00> : vector<8xf32>
    %22 = vector.multi_reduction <add>, %21, %cst_14 [1] : vector<8x8xf32> to vector<8xf32>
    %23 = vector.shape_cast %22 : vector<8xf32> to vector<8x1xf32>
    %24 = vector.broadcast %23 : vector<8x1xf32> to vector<8x8xf32>
    %25 = arith.divf %21, %24 : vector<8x8xf32>
    %c0_15 = arith.constant 0 : index
    %c0_16 = arith.constant 0 : index
    %c0_17 = arith.constant 0 : index
    %c0_18 = arith.constant 0 : index
    %26 = vector.load %arg7[%c0_15, %c0_16, %c0_17, %c0_18] : memref<1x1x8x8xf32, #tpu.memory_space<vmem>>, vector<1x1x8x8xf32>
    %27 = vector.shape_cast %26 : vector<1x1x8x8xf32> to vector<8x8xf32>
    %28 = vector.shape_cast %25 : vector<8x8xf32> to vector<1x1x8x8xf32>
    tpu.vector_store %arg7[%c0_15, %c0_16, %c0_17, %c0_18], %28 {strides = array<i32>} : memref<1x1x8x8xf32, #tpu.memory_space<vmem>>, vector<1x1x8x8xf32>,
    %cst_19 = arith.constant dense<0.000000e+00> : vector<8x8xf32>
    %29 = tpu.matmul %25, %7, %cst_19 {dimension_numbers = #tpu.dot_dimension_numbers<[1], [0], [0], [1], [0, 0, 1, 1], [], []>} : vector<8x8xf32>, vector<8x8xf32>, vector<8x8xf32> -> vector<8x8xf32>
    %c0_i32 = arith.constant 0 : i32
    %30 = arith.cmpi eq, %arg1, %c0_i32 : i32
    %31 = arith.extui %30 : i1 to i32
    %c0_i32_20 = arith.constant 0 : i32
    %32 = arith.cmpi ne, %31, %c0_i32_20 : i32
    scf.if %32 {
      %cst_27 = arith.constant 0.000000e+00 : f32
      %40 = vector.broadcast %cst_27 : f32 to vector<8x32xf32>
      %c0_28 = arith.constant 0 : index
      %c0_29 = arith.constant 0 : index
      %41 = vector.load %arg8[%c0_28, %c0_29] : memref<8x32xf32, #tpu.memory_space<vmem>>, vector<8x32xf32>
      tpu.vector_store %arg8[%c0_28, %c0_29], %40 {strides = array<i32>} : memref<8x32xf32, #tpu.memory_space<vmem>>, vector<8x32xf32>,
    } else {
    }
    %c0_21 = arith.constant 0 : index
    %c0_22 = arith.constant 0 : index
    %33 = vector.load %arg8[%c0_21, %c0_22] : memref<8x32xf32, #tpu.memory_space<vmem>>, vector<8x32xf32>
    %cst_23 = arith.constant dense<0.000000e+00> : vector<8x32xf32>
    %34 = tpu.matmul %29, %11, %cst_23 {dimension_numbers = #tpu.dot_dimension_numbers<[1], [0], [0], [1], [0, 0, 1, 1], [], []>} : vector<8x8xf32>, vector<8x32xf32>, vector<8x32xf32> -> vector<8x32xf32>
    %35 = arith.addf %33, %34 : vector<8x32xf32>
    %c0_24 = arith.constant 0 : index
    %c0_25 = arith.constant 0 : index
    %36 = vector.load %arg8[%c0_24, %c0_25] : memref<8x32xf32, #tpu.memory_space<vmem>>, vector<8x32xf32>
    tpu.vector_store %arg8[%c0_24, %c0_25], %35 {strides = array<i32>} : memref<8x32xf32, #tpu.memory_space<vmem>>, vector<8x32xf32>,
    %c3_i32 = arith.constant 3 : i32
    %37 = arith.cmpi eq, %arg1, %c3_i32 : i32
    %38 = arith.extui %37 : i1 to i32
    %c0_i32_26 = arith.constant 0 : i32
    %39 = arith.cmpi ne, %38, %c0_i32_26 : i32
    scf.if %39 {
      %c0_27 = arith.constant 0 : index
      %c0_28 = arith.constant 0 : index
      %40 = vector.load %arg8[%c0_27, %c0_28] : memref<8x32xf32, #tpu.memory_space<vmem>>, vector<8x32xf32>
      %c0_29 = arith.constant 0 : index
      %c0_30 = arith.constant 0 : index
      %c0_31 = arith.constant 0 : index
      %41 = vector.load %arg6[%c0_29, %c0_30, %c0_31] : memref<1x8x32xf32, #tpu.memory_space<vmem>>, vector<1x8x32xf32>
      %42 = vector.shape_cast %41 : vector<1x8x32xf32> to vector<8x32xf32>
      %43 = vector.shape_cast %40 : vector<8x32xf32> to vector<1x8x32xf32>
      tpu.vector_store %arg6[%c0_29, %c0_30, %c0_31], %43 {strides = array<i32>} : memref<1x8x32xf32, #tpu.memory_space<vmem>>, vector<1x8x32xf32>,
    } else {
    }
    return
  }
  func.func @transform_0(%arg0: i32, %arg1: i32) -> (i32, i32, i32) {
    %c0_i32 = arith.constant 0 : i32
    %c0_i32_0 = arith.constant 0 : i32
    %c0_i32_1 = arith.constant 0 : i32
    return %arg0, %c0_i32, %c0_i32_0 : i32, i32, i32
  }
  func.func @transform_1(%arg0: i32, %arg1: i32) -> (i32, i32, i32) {
    %c0_i32 = arith.constant 0 : i32
    %c0_i32_0 = arith.constant 0 : i32
    %c0_i32_1 = arith.constant 0 : i32
    return %arg0, %c0_i32, %c0_i32_0 : i32, i32, i32
  }
  func.func @transform_2(%arg0: i32, %arg1: i32) -> (i32, i32, i32) {
    %c0_i32 = arith.constant 0 : i32
    %c0_i32_0 = arith.constant 0 : i32
    %c0_i32_1 = arith.constant 0 : i32
    return %arg1, %c0_i32, %c0_i32_0 : i32, i32, i32
  }
  func.func @transform_3(%arg0: i32, %arg1: i32) -> (i32, i32, i32) {
    %c0_i32 = arith.constant 0 : i32
    %c0_i32_0 = arith.constant 0 : i32
    %c0_i32_1 = arith.constant 0 : i32
    return %arg1, %c0_i32, %c0_i32_0 : i32, i32, i32
  }
  func.func @transform_4(%arg0: i32, %arg1: i32) -> (i32, i32, i32) {
    %c0_i32 = arith.constant 0 : i32
    %c0_i32_0 = arith.constant 0 : i32
    %c0_i32_1 = arith.constant 0 : i32
    return %arg0, %c0_i32, %c0_i32_0 : i32, i32, i32
  }
  func.func @transform_5(%arg0: i32, %arg1: i32) -> (i32, i32, i32, i32) {
    %c0_i32 = arith.constant 0 : i32
    %c0_i32_0 = arith.constant 0 : i32
    %c0_i32_1 = arith.constant 0 : i32
    return %arg0, %arg1, %c0_i32, %c0_i32_0 : i32, i32, i32, i32
  }
}

</mosaic_0001>

<llo_original>
// kernel: tpu_custom_call.1
$region0: #{tpu_custom_call.1}
  #allocation0 [shape = 'u32[]', space=smem, size = 0x4, offset = 0x4, fixed_abs, tag = 'smem constant byte address 0x4 - core index']
  #allocation1 [shape = 'u32[144,128]{1,0:T(1,128)}', space=vmem, size = 0x12000, scoped, tag = 'internal scratch']
  #allocation2 [shape = 'f32[8,32]{1,0:T(8,128)}', space=vmem, size = 0x1000, scoped, tag = 'scratch operand']
  %s0 = inlined_call_operand.vmem [shape: f32[2,8,32], index: 0, kind: input, shape index: {}]
  %s1 = inlined_call_operand.vmem [shape: s8[2,8,8], index: 1, kind: input, shape index: {}]
  %s2 = inlined_call_operand.vmem [shape: f32[4,32,24], index: 2, kind: input, shape index: {}]
  %s3 = inlined_call_operand.vmem [shape: f32[4,8,32], index: 3, kind: input, shape index: {}]
  %s4 = inlined_call_operand.hbm [shape: f32[2,8,32], index: 4, kind: output, shape index: {0}]
  %s5 = inlined_call_operand.hbm [shape: f32[2,4,8,8], index: 5, kind: output, shape index: {1}]
  %6 = xla_tuple %s4, %s5
  %s7 = sld [smem:[#allocation0]]
  $region65: #{tpu_custom_call.1} parent=0
    _
  %s9 = ssub.s32 1, %s7
  %s10 = scalar_select 0, %s9, %s7
  $region1: #{tpu_custom_call.1} parent=0
    #allocation3 [shape = 'u8[8192]{0}', space=vmem, size = 0x2000, scoped, tag = 'output window, operand 0']
    #allocation4 [shape = 's32[2]{0}', space=sflag, size = 0x8, scoped, tag = 'scoped memory for tpu_custom_call.1']
    #allocation5 [shape = 'u8[8192]{0}', space=vmem, size = 0x2000, scoped, tag = 'output window, operand 1']
    #allocation6 [shape = 's32[2]{0}', space=sflag, size = 0x8, scoped, tag = 'scoped memory for tpu_custom_call.1']
    %11 = vsyncpa [#allocation4], 0
    %s12 = scalar_lea.sflag [#allocation4], 1
    %13 = vsyncpa %s12, 0
    %14 = vsyncpa [#allocation6], 0
    %s15 = scalar_lea.sflag [#allocation6], 1
    %16 = vsyncpa %s15, 0
    loop: start=0, step=1, limit=10
    $region2: #{tpu_custom_call.1} parent=1 // loop_pre_header
      _
    $region3: #{tpu_custom_call.1} parent=1 // loop_header
      %s18 = sphi 0, %s22
      %p19 = scmp.ge.s32.totalorder %s18, 10
      %s25 = sphi 0, %s37
      %s26 = sphi 0, %s33
      %s27 = sphi 0, %s25
      %s28 = sphi 0, %s26
      %s29 = sphi 0, %s27
      %s30 = sphi 0, %s28
      %s40 = sphi 0, %s42
      %s43 = sphi 0, %s40
      %s44 = sphi 0, %s43
      %s60 = sphi 0, %s44
      %s66 = sphi 0, %s68
      %s69 = sphi 0, %s66
      %s70 = sphi 0, %s69
      %s86 = sphi 0, %s70
      %s92 = sphi 0, %s94
      %s95 = sphi 0, %s92
      %s96 = sphi 0, %s95
      %s112 = sphi 0, %s96
      %s118 = sphi 0, %s120
      %s121 = sphi 0, %s118
      %s122 = sphi 0, %s121
      %s138 = sphi 0, %s122
      %s144 = sphi 0, %s146
      %s147 = sphi 0, %s144
      %s148 = sphi 0, %s147
      %s164 = sphi 0, %s148
      %s172 = sphi 0, %s174
      %s175 = sphi 0, %s172
      %s176 = sphi 0, %s175
      %s192 = sphi 0, %s176
    $region4: #{tpu_custom_call.1} parent=1 // loop_header_branch
      %21 = sbr.rel (%p19) target = $region8
    $region5: #{tpu_custom_call.1} parent=1 // loop_body
      %s23 = ssub.s32 %s18, 1
      %s24 = ssub.s32 %s18, 2
      %s31 = sadd.s32 1, %s26
      %p32 = scmp.ge.s32.totalorder %s31, 4
      %s33 = scalar_select %p32, 0, %s31
      %s34 = sadd.s32 1, %s25
      %s35 = scalar_select %p32, %s34, %s25
      %p36 = scmp.ge.s32.totalorder %s35, 2
      %s37 = scalar_select %p36, 0, %s35
      %s38 = ssub.s32 %s25, %s37
      %p39 = scmp.eq.s32.totalorder %s38, 0
      %s41 = sadd.s32 %s40, 1
      %s42 = scalar_select %p39, %s40, %s41
      %p45 = pneg %p39
      %p46 = scmp.eq.s32.totalorder %s18, 7
      %p47 = por %p45, %p46
      %p48 = scmp.ne.s32.totalorder %s40, %s43
      %p49 = scmp.eq.s32.totalorder %s18, 0
      %p50 = por %p48, %p49
      %p51 = scmp.ne.s32.totalorder %s40, %s43
      %p52 = scmp.eq.s32.totalorder %s23, 7
      %p53 = por %p51, %p52
      %p54 = scmp.ne.s32.totalorder %s43, %s44
      %p55 = scmp.eq.s32.totalorder %s23, 0
      %p56 = por %p54, %p55
      %p57 = scmp.ne.s32.totalorder %s43, %s44
      %p58 = scmp.eq.s32.totalorder %s24, 7
      %p59 = por %p57, %p58
      %p61 = scmp.ne.s32.totalorder %s44, %s60
      %p62 = scmp.eq.s32.totalorder %s24, 0
      %p63 = por %p61, %p62
      %s64 = ssub.s32 %s25, %s37
      %p65 = scmp.eq.s32.totalorder %s64, 0
      %s67 = sadd.s32 %s66, 1
      %s68 = scalar_select %p65, %s66, %s67
      %p71 = pneg %p65
      %p72 = scmp.eq.s32.totalorder %s18, 7
      %p73 = por %p71, %p72
      %p74 = scmp.ne.s32.totalorder %s66, %s69
      %p75 = scmp.eq.s32.totalorder %s18, 0
      %p76 = por %p74, %p75
      %p77 = scmp.ne.s32.totalorder %s66, %s69
      %p78 = scmp.eq.s32.totalorder %s23, 7
      %p79 = por %p77, %p78
      %p80 = scmp.ne.s32.totalorder %s69, %s70
      %p81 = scmp.eq.s32.totalorder %s23, 0
      %p82 = por %p80, %p81
      %p83 = scmp.ne.s32.totalorder %s69, %s70
      %p84 = scmp.eq.s32.totalorder %s24, 7
      %p85 = por %p83, %p84
      %p87 = scmp.ne.s32.totalorder %s70, %s86
      %p88 = scmp.eq.s32.totalorder %s24, 0
      %p89 = por %p87, %p88
      %s90 = ssub.s32 %s26, %s33
      %p91 = scmp.eq.s32.totalorder %s90, 0
      %s93 = sadd.s32 %s92, 1
      %s94 = scalar_select %p91, %s92, %s93
      %p97 = pneg %p91
      %p98 = scmp.eq.s32.totalorder %s18, 7
      %p99 = por %p97, %p98
      %p100 = scmp.ne.s32.totalorder %s92, %s95
      %p101 = scmp.eq.s32.totalorder %s18, 0
      %p102 = por %p100, %p101
      %p103 = scmp.ne.s32.totalorder %s92, %s95
      %p104 = scmp.eq.s32.totalorder %s23, 7
      %p105 = por %p103, %p104
      %p106 = scmp.ne.s32.totalorder %s95, %s96
      %p107 = scmp.eq.s32.totalorder %s23, 0
      %p108 = por %p106, %p107
      %p109 = scmp.ne.s32.totalorder %s95, %s96
      %p110 = scmp.eq.s32.totalorder %s24, 7
      %p111 = por %p109, %p110
      %p113 = scmp.ne.s32.totalorder %s96, %s112
      %p114 = scmp.eq.s32.totalorder %s24, 0
      %p115 = por %p113, %p114
      %s116 = ssub.s32 %s26, %s33
      %p117 = scmp.eq.s32.totalorder %s116, 0
      %s119 = sadd.s32 %s118, 1
      %s120 = scalar_select %p117, %s118, %s119
      %p123 = pneg %p117
      %p124 = scmp.eq.s32.totalorder %s18, 7
      %p125 = por %p123, %p124
      %p126 = scmp.ne.s32.totalorder %s118, %s121
      %p127 = scmp.eq.s32.totalorder %s18, 0
      %p128 = por %p126, %p127
      %p129 = scmp.ne.s32.totalorder %s118, %s121
      %p130 = scmp.eq.s32.totalorder %s23, 7
      %p131 = por %p129, %p130
      %p132 = scmp.ne.s32.totalorder %s121, %s122
      %p133 = scmp.eq.s32.totalorder %s23, 0
      %p134 = por %p132, %p133
      %p135 = scmp.ne.s32.totalorder %s121, %s122
      %p136 = scmp.eq.s32.totalorder %s24, 7
      %p137 = por %p135, %p136
      %p139 = scmp.ne.s32.totalorder %s122, %s138
      %p140 = scmp.eq.s32.totalorder %s24, 0
      %p141 = por %p139, %p140
      %s142 = ssub.s32 %s25, %s37
      %p143 = scmp.eq.s32.totalorder %s142, 0
      %s145 = sadd.s32 %s144, 1
      %s146 = scalar_select %p143, %s144, %s145
      %p149 = pneg %p143
      %p150 = scmp.eq.s32.totalorder %s18, 7
      %p151 = por %p149, %p150
      %p152 = scmp.ne.s32.totalorder %s144, %s147
      %p153 = scmp.eq.s32.totalorder %s18, 0
      %p154 = por %p152, %p153
      %p155 = scmp.ne.s32.totalorder %s144, %s147
      %p156 = scmp.eq.s32.totalorder %s23, 7
      %p157 = por %p155, %p156
      %p158 = scmp.ne.s32.totalorder %s147, %s148
      %p159 = scmp.eq.s32.totalorder %s23, 0
      %p160 = por %p158, %p159
      %p161 = scmp.ne.s32.totalorder %s147, %s148
      %p162 = scmp.eq.s32.totalorder %s24, 7
      %p163 = por %p161, %p162
      %p165 = scmp.ne.s32.totalorder %s148, %s164
      %p166 = scmp.eq.s32.totalorder %s24, 0
      %p167 = por %p165, %p166
      %s168 = ssub.s32 %s25, %s37
      %s169 = ssub.s32 %s26, %s33
      %s170 = sor.u32 %s168, %s169
      %p171 = scmp.eq.s32.totalorder %s170, 0
      %s173 = sadd.s32 %s172, 1
      %s174 = scalar_select %p171, %s172, %s173
      %p177 = pneg %p171
      %p178 = scmp.eq.s32.totalorder %s18, 7
      %p179 = por %p177, %p178
      %p180 = scmp.ne.s32.totalorder %s172, %s175
      %p181 = scmp.eq.s32.totalorder %s18, 0
      %p182 = por %p180, %p181
      %p183 = scmp.ne.s32.totalorder %s172, %s175
      %p184 = scmp.eq.s32.totalorder %s23, 7
      %p185 = por %p183, %p184
      %p186 = scmp.ne.s32.totalorder %s175, %s176
      %p187 = scmp.eq.s32.totalorder %s23, 0
      %p188 = por %p186, %p187
      %p189 = scmp.ne.s32.totalorder %s175, %s176
      %p190 = scmp.eq.s32.totalorder %s24, 7
      %p191 = por %p189, %p190
      %p193 = scmp.ne.s32.totalorder %s176, %s192
      %p194 = scmp.eq.s32.totalorder %s24, 0
      %p195 = por %p193, %p194
      %p196 = scmp.le.s32.totalorder 1, %s18
      %p197 = scmp.lt.s32.totalorder %s18, 9
      %p198 = pnand %p196, %p197
      %p199 = pneg %p198
      // Predicated region
      $region9: #{tpu_custom_call.1} parent=5 // pred_check
        _
      $region10: #{tpu_custom_call.1} parent=5 // pred_check_branch
        %201 = sbr.rel (%p198) target = $region12
      $region11: #{tpu_custom_call.1} parent=5 // pred_region
        %s202 = ssub.s32 %s18, 1
      $region12: #{tpu_custom_call.1} parent=5 // pred_fallthru
        _
      %p203 = scmp.lt.s32.totalorder %s18, 8
      // Predicated region
      $region13: #{tpu_custom_call.1} parent=5 // pred_check
        %p204 = pneg %p203
      $region14: #{tpu_custom_call.1} parent=5 // pred_check_branch
        %206 = sbr.rel (%p204) target = $region16
      $region15: #{tpu_custom_call.1} parent=5 // pred_region
        // Predicated region
        $region17: #{tpu_custom_call.1} parent=15 // pred_check
          %p207 = pneg %p50
        $region18: #{tpu_custom_call.1} parent=15 // pred_check_branch
          %209 = sbr.rel (%p207) target = $region20
        $region19: #{tpu_custom_call.1} parent=15 // pred_region
          %p210 = scmp.lt.s32.totalorder %s25, 1
          %s211 = scalar_select %p210, %s25, 1
          %s212 = smul.addr %s211, 8
          %s213 = scalar_lea.vmem %s0, %s212
        $region20: #{tpu_custom_call.1} parent=15 // pred_fallthru
          _
        // Predicated region
        $region21: #{tpu_custom_call.1} parent=15 // pred_check
          %p214 = pneg %p76
        $region22: #{tpu_custom_call.1} parent=15 // pred_check_branch
          %216 = sbr.rel (%p214) target = $region24
        $region23: #{tpu_custom_call.1} parent=15 // pred_region
          %p217 = scmp.lt.s32.totalorder %s25, 1
          %s218 = scalar_select %p217, %s25, 1
          %s219 = smul.addr %s218, 2
          %s220 = scalar_lea.vmem %s1, %s219
        $region24: #{tpu_custom_call.1} parent=15 // pred_fallthru
          _
        // Predicated region
        $region25: #{tpu_custom_call.1} parent=15 // pred_check
          %p221 = pneg %p102
        $region26: #{tpu_custom_call.1} parent=15 // pred_check_branch
          %223 = sbr.rel (%p221) target = $region28
        $region27: #{tpu_custom_call.1} parent=15 // pred_region
          %p224 = scmp.lt.s32.totalorder %s26, 3
          %s225 = scalar_select %p224, %s26, 3
          %s226 = smul.addr %s225, 4
          %s227 = smul.addr %s226, 8
          %s228 = scalar_lea.vmem %s2, %s227
        $region28: #{tpu_custom_call.1} parent=15 // pred_fallthru
          _
        // Predicated region
        $region29: #{tpu_custom_call.1} parent=15 // pred_check
          %p229 = pneg %p128
        $region30: #{tpu_custom_call.1} parent=15 // pred_check_branch
          %231 = sbr.rel (%p229) target = $region32
        $region31: #{tpu_custom_call.1} parent=15 // pred_region
          %p232 = scmp.lt.s32.totalorder %s26, 3
          %s233 = scalar_select %p232, %s26, 3
          %s234 = smul.addr %s233, 8
          %s235 = scalar_lea.vmem %s3, %s234
        $region32: #{tpu_custom_call.1} parent=15 // pred_fallthru
          _
      $region16: #{tpu_custom_call.1} parent=5 // pred_fallthru
        _
      %p236 = scmp.le.s32.totalorder 1, %s18
      %p237 = scmp.lt.s32.totalorder %s18, 9
      %p238 = pnand %p236, %p237
      %p239 = pneg %p238
      // Predicated region
      $region33: #{tpu_custom_call.1} parent=5 // pred_check
        _
      $region34: #{tpu_custom_call.1} parent=5 // pred_check_branch
        %241 = sbr.rel (%p238) target = $region36
      $region35: #{tpu_custom_call.1} parent=5 // pred_region
        %s242 = ssub.s32 %s18, 1
        %p243 = scmp.lt.s32.totalorder %s27, 1
        %s244 = scalar_select %p243, %s27, 1
        %s245 = smul.addr %s244, 8
        %s246 = scalar_lea.vmem %s0, %s245
        %p247 = pneg %p56
        %p248 = pneg %p53
        %p249 = scmp.lt.s32.totalorder %s27, 1
        %s250 = scalar_select %p249, %s27, 1
        %s251 = smul.addr %s250, 2
        %s252 = scalar_lea.vmem %s1, %s251
        %p253 = pneg %p82
        %p254 = pneg %p79
        %p255 = scmp.lt.s32.totalorder %s28, 3
        %s256 = scalar_select %p255, %s28, 3
        %s257 = smul.addr %s256, 4
        %s258 = smul.addr %s257, 8
        %s259 = scalar_lea.vmem %s2, %s258
        %p260 = pneg %p108
        %p261 = pneg %p105
        %p262 = scmp.lt.s32.totalorder %s28, 3
        %s263 = scalar_select %p262, %s28, 3
        %s264 = smul.addr %s263, 8
        %s265 = scalar_lea.vmem %s3, %s264
        %p266 = pneg %p134
        %p267 = pneg %p131
        %p268 = pneg %p160
        %p269 = pneg %p157
        %s270 = sand.u32 %s147, 1
        %s271 = scalar_lea.sflag [#allocation4], %s270
        %s272 = sand.u32 %s147, 1
        %s273 = smul.addr %s272, 8
        %s274 = scalar_lea.vmem [#allocation3], %s273
        %p275 = pneg %p188
        %p276 = pneg %p185
        %s277 = sand.u32 %s175, 1
        %s278 = scalar_lea.sflag [#allocation6], %s277
        %s279 = sand.u32 %s175, 1
        %s280 = smul.addr %s279, 8
        %s281 = scalar_lea.vmem [#allocation5], %s280
        %p282 = scmp.lt.s32.totalorder %s27, 1
        %s283 = scalar_select %p282, %s27, 1
        %s284 = smul.addr %s283, 8
        %s285 = scalar_lea.vmem %s0, %s284
        %p286 = scmp.lt.s32.totalorder %s27, 1
        %s287 = scalar_select %p286, %s27, 1
        %s288 = smul.addr %s287, 2
        %s289 = scalar_lea.vmem %s1, %s288
        %p290 = scmp.lt.s32.totalorder %s28, 3
        %s291 = scalar_select %p290, %s28, 3
        %s292 = smul.addr %s291, 4
        %s293 = smul.addr %s292, 8
        %s294 = scalar_lea.vmem %s2, %s293
        %p295 = scmp.lt.s32.totalorder %s28, 3
        %s296 = scalar_select %p295, %s28, 3
        %s297 = smul.addr %s296, 8
        %s298 = scalar_lea.vmem %s3, %s297
        %v301 = vld [vmem:[%s285] sm:$0xff]
        %v302 = vld [vmem:[%s294] sm:$0xff]
        %v303 = vld [vmem:[%s294 + $0x8] sm:$0xff]
        %v304 = vld [vmem:[%s294 + $0x10] sm:$0xff]
        %v305 = vld [vmem:[%s294 + $0x18] sm:$0xff]
        %vm306 = vcmask 261120
        %v308 = vsel %vm306, %v301, 0
        %310 = vmatprep.subr.mxu0 0.0
        %311 = vmatpush1.msra.mxu0 0.0
        %312 = vmatprep.subr.mxu0 0.0
        %313 = vmatpush1.msra.mxu0 0.0
        %314 = vmatprep.subr.mxu0 0.0
        %315 = vmatpush1.msra.mxu0 0.0
        %316 = vmatprep.subr.mxu0 0.0
        %317 = vmatpush1.msra.mxu0 0.0
        %318 = vmatprep.subr.mxu0 0.0
        %319 = vmatpush1.msra.mxu0 0.0
        %320 = vmatprep.subr.mxu0 0.0
        %321 = vmatpush1.msra.mxu0 0.0
        %322 = vmatprep.subr.mxu0 0.0
        %323 = vmatpush1.msra.mxu0 0.0
        %324 = vmatprep.subr.mxu0 0.0
        %325 = vmatpush1.msra.mxu0 0.0
        %326 = vmatprep.subr.mxu0 0.0
        %327 = vmatpush1.msra.mxu0 0.0
        %328 = vmatprep.subr.mxu0 0.0
        %329 = vmatpush1.msra.mxu0 0.0
        %330 = vmatprep.subr.mxu0 0.0
        %331 = vmatpush1.msra.mxu0 0.0
        %332 = vmatprep.subr.mxu0 0.0
        %333 = vmatpush1.msra.mxu0 0.0
        %334 = vmatprep.subr.mxu0 0.0
        %335 = vmatpush1.msra.mxu0 %v305
        %336 = vmatprep.subr.mxu0 0.0
        %337 = vmatpush1.msra.mxu0 %v304
        %338 = vmatprep.subr.mxu0 0.0
        %339 = vmatpush1.msra.mxu0 %v303
        %340 = vmatprep.subr.mxu0 0.0
        %341 = vmatpush1.msra.mxu0 %v302
        %342 = vmatprep.subr.mxu0 0.0
        %343 = vmatpush2.msra.mxu0 0.0
        %344 = vmatprep.subr.mxu0 0.0
        %345 = vmatpush2.msra.mxu0 0.0
        %346 = vmatprep.subr.mxu0 0.0
        %347 = vmatpush2.msra.mxu0 0.0
        %348 = vmatprep.subr.mxu0 0.0
        %349 = vmatpush2.msra.mxu0 0.0
        %350 = vmatprep.subr.mxu0 0.0
        %351 = vmatpush2.msra.mxu0 0.0
        %352 = vmatprep.subr.mxu0 0.0
        %353 = vmatpush2.msra.mxu0 0.0
        %354 = vmatprep.subr.mxu0 0.0
        %355 = vmatpush2.msra.mxu0 0.0
        %356 = vmatprep.subr.mxu0 0.0
        %357 = vmatpush2.msra.mxu0 0.0
        %358 = vmatprep.subr.mxu0 0.0
        %359 = vmatpush2.msra.mxu0 0.0
        %360 = vmatprep.subr.mxu0 0.0
        %361 = vmatpush2.msra.mxu0 0.0
        %362 = vmatprep.subr.mxu0 0.0
        %363 = vmatpush2.msra.mxu0 0.0
        %364 = vmatprep.subr.mxu0 0.0
        %365 = vmatpush2.msra.mxu0 0.0
        %366 = vmatprep.subr.mxu0 0.0
        %367 = vmatpush2.msra.mxu0 0.0
        %368 = vmatprep.subr.mxu0 0.0
        %369 = vmatpush2.msra.mxu0 0.0
        %370 = vmatprep.subr.mxu0 0.0
        %371 = vmatpush2.msra.mxu0 0.0
        %372 = vmatprep.subr.mxu0 0.0
        %373 = vmatpush2.msra.mxu0 0.0
        %374 = vmatprep.mubr.f32.mxu0 0.0
        %375 = vmatmul.mubr.f32.gmra.mxu0 %v308
        %v376 = vpop.f32.mrf.mxu0
        %v377 = vadd.f32 0.0, %v376
        %v378 = vpop.f32.mrf.mxu0
        %379 = vdwg.mxu0
        %v380 = vld [vmem:[%s289] sm:$0x3]
        %v381 = vld [vmem:[%s298] sm:$0xff]
        %383 = vrot.lane.b32.xlu0 %v377, 120
        %v384 = vpop.permute.xlu0 %383
        %vm385 = vcmask 64512
        %v386 = vsel %vm385, %v377, 0
        %v388 = vsel %vm385, %v384, 0
        %390 = vmatprep.subr.mxu0 0.0
        %391 = vmatpush1.xpose.msra.mxu0 0.0
        %392 = vmatprep.subr.mxu0 0.0
        %393 = vmatpush1.xpose.msra.mxu0 0.0
        %394 = vmatprep.subr.mxu0 0.0
        %395 = vmatpush1.xpose.msra.mxu0 0.0
        %396 = vmatprep.subr.mxu0 0.0
        %397 = vmatpush1.xpose.msra.mxu0 0.0
        %398 = vmatprep.subr.mxu0 0.0
        %399 = vmatpush1.xpose.msra.mxu0 0.0
        %400 = vmatprep.subr.mxu0 0.0
        %401 = vmatpush1.xpose.msra.mxu0 0.0
        %402 = vmatprep.subr.mxu0 0.0
        %403 = vmatpush1.xpose.msra.mxu0 0.0
        %404 = vmatprep.subr.mxu0 0.0
        %405 = vmatpush1.xpose.msra.mxu0 0.0
        %406 = vmatprep.subr.mxu0 0.0
        %407 = vmatpush1.xpose.msra.mxu0 0.0
        %408 = vmatprep.subr.mxu0 0.0
        %409 = vmatpush1.xpose.msra.mxu0 0.0
        %410 = vmatprep.subr.mxu0 0.0
        %411 = vmatpush1.xpose.msra.mxu0 0.0
        %412 = vmatprep.subr.mxu0 0.0
        %413 = vmatpush1.xpose.msra.mxu0 0.0
        %414 = vmatprep.subr.mxu0 0.0
        %415 = vmatpush1.xpose.msra.mxu0 0.0
        %416 = vmatprep.subr.mxu0 0.0
        %417 = vmatpush1.xpose.msra.mxu0 0.0
        %418 = vmatprep.subr.mxu0 0.0
        %419 = vmatpush1.xpose.msra.mxu0 0.0
        %420 = vmatprep.subr.mxu0 0.0
        %421 = vmatpush1.xpose.msra.mxu0 %v388
        %422 = vmatprep.subr.mxu0 0.0
        %423 = vmatpush2.xpose.msra.mxu0 0.0
        %424 = vmatprep.subr.mxu0 0.0
        %425 = vmatpush2.xpose.msra.mxu0 0.0
        %426 = vmatprep.subr.mxu0 0.0
        %427 = vmatpush2.xpose.msra.mxu0 0.0
        %428 = vmatprep.subr.mxu0 0.0
        %429 = vmatpush2.xpose.msra.mxu0 0.0
        %430 = vmatprep.subr.mxu0 0.0
        %431 = vmatpush2.xpose.msra.mxu0 0.0
        %432 = vmatprep.subr.mxu0 0.0
        %433 = vmatpush2.xpose.msra.mxu0 0.0
        %434 = vmatprep.subr.mxu0 0.0
        %435 = vmatpush2.xpose.msra.mxu0 0.0
        %436 = vmatprep.subr.mxu0 0.0
        %437 = vmatpush2.xpose.msra.mxu0 0.0
        %438 = vmatprep.subr.mxu0 0.0
        %439 = vmatpush2.xpose.msra.mxu0 0.0
        %440 = vmatprep.subr.mxu0 0.0
        %441 = vmatpush2.xpose.msra.mxu0 0.0
        %442 = vmatprep.subr.mxu0 0.0
        %443 = vmatpush2.xpose.msra.mxu0 0.0
        %444 = vmatprep.subr.mxu0 0.0
        %445 = vmatpush2.xpose.msra.mxu0 0.0
        %446 = vmatprep.subr.mxu0 0.0
        %447 = vmatpush2.xpose.msra.mxu0 0.0
        %448 = vmatprep.subr.mxu0 0.0
        %449 = vmatpush2.xpose.msra.mxu0 0.0
        %450 = vmatprep.subr.mxu0 0.0
        %451 = vmatpush2.xpose.msra.mxu0 0.0
        %452 = vmatprep.subr.mxu0 0.0
        %453 = vmatpush2.xpose.msra.mxu0 0.0
        %454 = vmatprep.mubr.f32.mxu0 0.0
        %455 = vmatmul.mubr.f32.gmra.mxu0 %v386
        %v456 = vpop.f32.mrf.mxu0
        %v457 = vadd.f32 0.0, %v456
        %v458 = vpop.f32.mrf.mxu0
        %459 = vdwg.mxu0
        %vm460 = vnez %v380
        %v461 = vsel %vm460, 16843009, 0
        %v462 = vunpack.c.0.s8 %v461
        %vm463 = vcmp.ne.s32.totalorder %v462, 0
        %v464 = vsel %vm463, -1e+09, %v457
        %v465 = vsel %vm385, %v464, -inf
        %466 = vmax.xlane.f32.xlu0 %v465
        %v467 = vpop.xlane.xlu0 %466
        %v468 = vsub.f32 %v464, %v467
        %v469 = vmul.f32 %v468, 1.442695
        %v470 = vpow.pop %v469
        %v471 = vsel %vm385, %v470, 0.0
        %472 = vadd.xlane.f32.xlu0 %v471
        %v473 = vpop.xlane.xlu0 %472
        %v474 = vrcp.pop %v473
        %v475 = vmul.f32 %v470, %v474
        %476 = vst.msk [vmem:[%s281] sm:$0xff] %vm385, %v475
        %477 = vrot.lane.b32.xlu0 %v377, 112
        %v478 = vpop.permute.xlu0 %477
        %v481 = vsel %vm385, %v475, 0
        %483 = vmatprep.subr.mxu0 0.0
        %484 = vmatpush1.msra.mxu0 0.0
        %485 = vmatprep.subr.mxu0 0.0
        %486 = vmatpush1.msra.mxu0 0.0
        %487 = vmatprep.subr.mxu0 0.0
        %488 = vmatpush1.msra.mxu0 0.0
        %489 = vmatprep.subr.mxu0 0.0
        %490 = vmatpush1.msra.mxu0 0.0
        %491 = vmatprep.subr.mxu0 0.0
        %492 = vmatpush1.msra.mxu0 0.0
        %493 = vmatprep.subr.mxu0 0.0
        %494 = vmatpush1.msra.mxu0 0.0
        %495 = vmatprep.subr.mxu0 0.0
        %496 = vmatpush1.msra.mxu0 0.0
        %497 = vmatprep.subr.mxu0 0.0
        %498 = vmatpush1.msra.mxu0 0.0
        %499 = vmatprep.subr.mxu0 0.0
        %500 = vmatpush1.msra.mxu0 0.0
        %501 = vmatprep.subr.mxu0 0.0
        %502 = vmatpush1.msra.mxu0 0.0
        %503 = vmatprep.subr.mxu0 0.0
        %504 = vmatpush1.msra.mxu0 0.0
        %505 = vmatprep.subr.mxu0 0.0
        %506 = vmatpush1.msra.mxu0 0.0
        %507 = vmatprep.subr.mxu0 0.0
        %508 = vmatpush1.msra.mxu0 0.0
        %509 = vmatprep.subr.mxu0 0.0
        %510 = vmatpush1.msra.mxu0 0.0
        %511 = vmatprep.subr.mxu0 0.0
        %512 = vmatpush1.msra.mxu0 0.0
        %513 = vmatprep.subr.mxu0 0.0
        %514 = vmatpush1.msra.mxu0 %v478
        %515 = vmatprep.subr.mxu0 0.0
        %516 = vmatpush2.msra.mxu0 0.0
        %517 = vmatprep.subr.mxu0 0.0
        %518 = vmatpush2.msra.mxu0 0.0
        %519 = vmatprep.subr.mxu0 0.0
        %520 = vmatpush2.msra.mxu0 0.0
        %521 = vmatprep.subr.mxu0 0.0
        %522 = vmatpush2.msra.mxu0 0.0
        %523 = vmatprep.subr.mxu0 0.0
        %524 = vmatpush2.msra.mxu0 0.0
        %525 = vmatprep.subr.mxu0 0.0
        %526 = vmatpush2.msra.mxu0 0.0
        %527 = vmatprep.subr.mxu0 0.0
        %528 = vmatpush2.msra.mxu0 0.0
        %529 = vmatprep.subr.mxu0 0.0
        %530 = vmatpush2.msra.mxu0 0.0
        %531 = vmatprep.subr.mxu0 0.0
        %532 = vmatpush2.msra.mxu0 0.0
        %533 = vmatprep.subr.mxu0 0.0
        %534 = vmatpush2.msra.mxu0 0.0
        %535 = vmatprep.subr.mxu0 0.0
        %536 = vmatpush2.msra.mxu0 0.0
        %537 = vmatprep.subr.mxu0 0.0
        %538 = vmatpush2.msra.mxu0 0.0
        %539 = vmatprep.subr.mxu0 0.0
        %540 = vmatpush2.msra.mxu0 0.0
        %541 = vmatprep.subr.mxu0 0.0
        %542 = vmatpush2.msra.mxu0 0.0
        %543 = vmatprep.subr.mxu0 0.0
        %544 = vmatpush2.msra.mxu0 0.0
        %545 = vmatprep.subr.mxu0 0.0
        %546 = vmatpush2.msra.mxu0 0.0
        %547 = vmatprep.mubr.f32.mxu0 0.0
        %548 = vmatmul.mubr.f32.gmra.mxu0 %v481
        %v549 = vpop.f32.mrf.mxu0
        %v550 = vadd.f32 0.0, %v549
        %v551 = vpop.f32.mrf.mxu0
        %552 = vdwg.mxu0
        %p553 = scmp.eq.s32.totalorder %s28, 0
        // Predicated region
        $region37: #{tpu_custom_call.1} parent=35 // pred_check
          %p554 = pneg %p553
        $region38: #{tpu_custom_call.1} parent=35 // pred_check_branch
          %556 = sbr.rel (%p554) target = $region40
        $region39: #{tpu_custom_call.1} parent=35 // pred_region
          %557 = vst.msk [vmem:[#allocation2] sm:$0xff] %vm306, 0.0
        $region40: #{tpu_custom_call.1} parent=35 // pred_fallthru
          _
        %v558 = vld [vmem:[#allocation2] sm:$0xff]
        %v560 = vsel %vm385, %v550, 0
        %562 = vmatprep.subr.mxu0 0.0
        %563 = vmatpush1.msra.mxu0 0.0
        %564 = vmatprep.subr.mxu0 0.0
        %565 = vmatpush1.msra.mxu0 0.0
        %566 = vmatprep.subr.mxu0 0.0
        %567 = vmatpush1.msra.mxu0 0.0
        %568 = vmatprep.subr.mxu0 0.0
        %569 = vmatpush1.msra.mxu0 0.0
        %570 = vmatprep.subr.mxu0 0.0
        %571 = vmatpush1.msra.mxu0 0.0
        %572 = vmatprep.subr.mxu0 0.0
        %573 = vmatpush1.msra.mxu0 0.0
        %574 = vmatprep.subr.mxu0 0.0
        %575 = vmatpush1.msra.mxu0 0.0
        %576 = vmatprep.subr.mxu0 0.0
        %577 = vmatpush1.msra.mxu0 0.0
        %578 = vmatprep.subr.mxu0 0.0
        %579 = vmatpush1.msra.mxu0 0.0
        %580 = vmatprep.subr.mxu0 0.0
        %581 = vmatpush1.msra.mxu0 0.0
        %582 = vmatprep.subr.mxu0 0.0
        %583 = vmatpush1.msra.mxu0 0.0
        %584 = vmatprep.subr.mxu0 0.0
        %585 = vmatpush1.msra.mxu0 0.0
        %586 = vmatprep.subr.mxu0 0.0
        %587 = vmatpush1.msra.mxu0 0.0
        %588 = vmatprep.subr.mxu0 0.0
        %589 = vmatpush1.msra.mxu0 0.0
        %590 = vmatprep.subr.mxu0 0.0
        %591 = vmatpush1.msra.mxu0 0.0
        %592 = vmatprep.subr.mxu0 0.0
        %593 = vmatpush1.msra.mxu0 %v381
        %594 = vmatprep.subr.mxu0 0.0
        %595 = vmatpush2.msra.mxu0 0.0
        %596 = vmatprep.subr.mxu0 0.0
        %597 = vmatpush2.msra.mxu0 0.0
        %598 = vmatprep.subr.mxu0 0.0
        %599 = vmatpush2.msra.mxu0 0.0
        %600 = vmatprep.subr.mxu0 0.0
        %601 = vmatpush2.msra.mxu0 0.0
        %602 = vmatprep.subr.mxu0 0.0
        %603 = vmatpush2.msra.mxu0 0.0
        %604 = vmatprep.subr.mxu0 0.0
        %605 = vmatpush2.msra.mxu0 0.0
        %606 = vmatprep.subr.mxu0 0.0
        %607 = vmatpush2.msra.mxu0 0.0
        %608 = vmatprep.subr.mxu0 0.0
        %609 = vmatpush2.msra.mxu0 0.0
        %610 = vmatprep.subr.mxu0 0.0
        %611 = vmatpush2.msra.mxu0 0.0
        %612 = vmatprep.subr.mxu0 0.0
        %613 = vmatpush2.msra.mxu0 0.0
        %614 = vmatprep.subr.mxu0 0.0
        %615 = vmatpush2.msra.mxu0 0.0
        %616 = vmatprep.subr.mxu0 0.0
        %617 = vmatpush2.msra.mxu0 0.0
        %618 = vmatprep.subr.mxu0 0.0
        %619 = vmatpush2.msra.mxu0 0.0
        %620 = vmatprep.subr.mxu0 0.0
        %621 = vmatpush2.msra.mxu0 0.0
        %622 = vmatprep.subr.mxu0 0.0
        %623 = vmatpush2.msra.mxu0 0.0
        %624 = vmatprep.subr.mxu0 0.0
        %625 = vmatpush2.msra.mxu0 0.0
        %626 = vmatprep.mubr.f32.mxu0 0.0
        %627 = vmatmul.mubr.f32.gmra.mxu0 %v560
        %v628 = vpop.f32.mrf.mxu0
        %v629 = vadd.f32 0.0, %v628
        %v630 = vpop.f32.mrf.mxu0
        %631 = vdwg.mxu0
        %v632 = vadd.f32 %v558, %v629
        %633 = vst.msk [vmem:[#allocation2] sm:$0xff] %vm306, %v632
        %p634 = scmp.eq.s32.totalorder %s28, 3
        // Predicated region
        $region41: #{tpu_custom_call.1} parent=35 // pred_check
          %p635 = pneg %p634
        $region42: #{tpu_custom_call.1} parent=35 // pred_check_branch
          %637 = sbr.rel (%p635) target = $region44
        $region43: #{tpu_custom_call.1} parent=35 // pred_region
          %v638 = vld [vmem:[#allocation2] sm:$0xff]
          %639 = vst.msk [vmem:[%s274] sm:$0xff] %vm306, %v638
        $region44: #{tpu_custom_call.1} parent=35 // pred_fallthru
          _
        %s640 = sand.u32 %s147, 1
        %s641 = scalar_lea.sflag [#allocation4], %s640
        %s642 = sand.u32 %s147, 1
        %s643 = smul.addr %s642, 8
        %s644 = scalar_lea.vmem [#allocation3], %s643
        %s645 = sand.u32 %s175, 1
        %s646 = scalar_lea.sflag [#allocation6], %s645
        %s647 = sand.u32 %s175, 1
        %s648 = smul.addr %s647, 8
        %s649 = scalar_lea.vmem [#allocation5], %s648
        // Predicated region
        $region45: #{tpu_custom_call.1} parent=35 // pred_check
          %p650 = pneg %p157
        $region46: #{tpu_custom_call.1} parent=35 // pred_check_branch
          %652 = sbr.rel (%p650) target = $region48
        $region47: #{tpu_custom_call.1} parent=35 // pred_region
          %s654 = ssub.s32 128, 128
          %655 = vsyncadd %s641, %s654
          %s656 = smul.addr %s27, 128
          %s657 = scalar_lea.hbm %s4, %s656
          %s659 = sshll.u32 %s644, 4
          %s660 = int_to_ptr.vmem [resolvable:$true] %s659
          %662 = dma.vmem_to_hbm [thread:$0]  %s660, 128, %s657, %s641
        $region48: #{tpu_custom_call.1} parent=35 // pred_fallthru
          _
        // Predicated region
        $region49: #{tpu_custom_call.1} parent=35 // pred_check
          %p663 = pneg %p185
        $region50: #{tpu_custom_call.1} parent=35 // pred_check_branch
          %665 = sbr.rel (%p663) target = $region52
        $region51: #{tpu_custom_call.1} parent=35 // pred_region
          %s667 = ssub.s32 128, 128
          %668 = vsyncadd %s646, %s667
          %s669 = smul.addr %s27, 4
          %s670 = sadd.s32 %s28, %s669
          %s671 = smul.addr %s670, 128
          %s672 = scalar_lea.hbm %s5, %s671
          %s674 = sshll.u32 %s649, 4
          %s675 = int_to_ptr.vmem [resolvable:$true] %s674
          %677 = dma.vmem_to_hbm [thread:$0]  %s675, 128, %s672, %s646
        $region52: #{tpu_custom_call.1} parent=35 // pred_fallthru
          _
      $region36: #{tpu_custom_call.1} parent=5 // pred_fallthru
        _
      %p678 = scmp.le.s32.totalorder 2, %s18
      // Predicated region
      $region53: #{tpu_custom_call.1} parent=5 // pred_check
        %p679 = pneg %p678
      $region54: #{tpu_custom_call.1} parent=5 // pred_check_branch
        %681 = sbr.rel (%p679) target = $region56
      $region55: #{tpu_custom_call.1} parent=5 // pred_region
        %s682 = ssub.s32 %s18, 2
        // Predicated region
        $region57: #{tpu_custom_call.1} parent=55 // pred_check
          %p683 = pneg %p163
        $region58: #{tpu_custom_call.1} parent=55 // pred_check_branch
          %685 = sbr.rel (%p683) target = $region60
        $region59: #{tpu_custom_call.1} parent=55 // pred_region
          %s686 = sand.u32 %s148, 1
          %s687 = scalar_lea.sflag [#allocation4], %s686
          %s688 = sand.u32 %s148, 1
          %s689 = smul.addr %s688, 8
          %s690 = scalar_lea.vmem [#allocation3], %s689
          %691 = dma.done %s687, 128
        $region60: #{tpu_custom_call.1} parent=55 // pred_fallthru
          _
        // Predicated region
        $region61: #{tpu_custom_call.1} parent=55 // pred_check
          %p692 = pneg %p191
        $region62: #{tpu_custom_call.1} parent=55 // pred_check_branch
          %694 = sbr.rel (%p692) target = $region64
        $region63: #{tpu_custom_call.1} parent=55 // pred_region
          %s695 = sand.u32 %s176, 1
          %s696 = scalar_lea.sflag [#allocation6], %s695
          %s697 = sand.u32 %s176, 1
          %s698 = smul.addr %s697, 8
          %s699 = scalar_lea.vmem [#allocation5], %s698
          %700 = dma.done %s696, 128
        $region64: #{tpu_custom_call.1} parent=55 // pred_fallthru
          _
      $region56: #{tpu_custom_call.1} parent=5 // pred_fallthru
        _
    $region6: #{tpu_custom_call.1} parent=1 // loop_footer
      %s22 = sadd.s32 1, %s18
    $region7: #{tpu_custom_call.1} parent=1 // loop_footer_branch
      %17 = sbr.rel target = $region3
    $region8: #{tpu_custom_call.1} parent=1 // loop_exit
      _
    %701 = vsyncpa [#allocation4], 1
    %s702 = scalar_lea.sflag [#allocation4], 1
    %703 = vsyncpa %s702, 1
    %704 = vsyncpa [#allocation6], 1
    %s705 = scalar_lea.sflag [#allocation6], 1
    %706 = vsyncpa %s705, 1

</llo_original>
